<compile_context>
chip_gen: v6e
topology: v6e:2x2x1
jax: 0.10.0
libtpu: 0.0.40
codegen_flags: <defaults>
</compile_context>

<pallas_src>
import functools

import jax
import jax.numpy as jnp
from jax.experimental import pallas as pl
from jax.experimental.pallas import tpu as pltpu

_NEG_INIT = -1.0e30  # finite "minus infinity" sentinel for the running max


def _admsoftmax_kernel(target_ref, logits_ref, out_ref, m_acc, sum_acc,
                       *, s, m, num_classes, ragged):
    k = pl.program_id(1)
    nk = pl.num_programs(1)

    @pl.when(k == 0)
    def _():
        m_acc[...] = jnp.full_like(m_acc, _NEG_INIT)
        sum_acc[...] = jnp.zeros_like(sum_acc)

    # bf16 inputs are upcast here (free relative to the saved HBM bytes).
    sl = s * logits_ref[...].astype(jnp.float32)            # (TB, TC) f32
    TB, TC = sl.shape
    L = m_acc.shape[1]                                       # 128 (or C if C < 128)
    strips = TC // L

    if ragged:
        lane_ids = jax.lax.broadcasted_iota(jnp.int32, (TB, L), 1)
        base = k * TC

    # Pass 1: per-lane running max — elementwise VALU max over static,
    # (8,128)-aligned lane strips (no cross-lane XLU work in the hot loop).
    m_prev = m_acc[...]
    m_new = m_prev
    for t in range(strips):
        st = sl[:, t * L:(t + 1) * L]
        if ragged:
            st = jnp.where(lane_ids < num_classes - base - t * L, st, _NEG_INIT)
        m_new = jnp.maximum(m_new, st)

    # Pass 2: per-lane shifted exp-sum (EUP exp + VALU adds).
    acc = sum_acc[...] * jnp.exp(m_prev - m_new)
    for t in range(strips):
        p = jnp.exp(sl[:, t * L:(t + 1) * L] - m_new)
        if ragged:
            p = jnp.where(lane_ids < num_classes - base - t * L, p, 0.0)
        acc = acc + p
    sum_acc[...] = acc
    m_acc[...] = m_new

    @pl.when(k == nk - 1)
    def _():
        # Single cross-lane (XLU) combine of the per-lane partials, once per
        # batch tile.
        m_lane = m_acc[...]                                  # (TB, L)
        row_max = jnp.max(m_lane, axis=1, keepdims=True)     # (TB, 1)
        total = jnp.sum(jnp.exp(m_lane - row_max) * sum_acc[...],
                        axis=1, keepdims=True)               # (TB, 1)

        tgt = target_ref[...]                                # (TB, 1) pre-gathered f32
        numerator = s * (tgt - m)
        # excl (shifted by row_max) = total row sum minus the target's own term;
        # clamp against subtractive cancellation.
        excl = jnp.maximum(total - jnp.exp(s * tgt - row_max), 0.0)
        denom = jnp.maximum(jnp.exp(numerator - row_max) + excl, 1e-30)
        loss = numerator - (row_max + jnp.log(denom))        # (TB, 1)
        # Lane-dense broadcast write -> unmasked full-width vector stores.
        out_ref[...] = jnp.broadcast_to(loss, out_ref.shape)


def _round_up(x, n):
    return ((x + n - 1) // n) * n


def _default_vmem_limit_bytes():
    # 64 MiB scoped on 128-MiB-VMEM chips (v5e / v6e); 32 MiB on 64-MiB v7x.
    try:
        cap = pltpu.get_tpu_info().vmem_capacity_bytes
    except Exception:  # unknown chip / interpret mode -> be conservative (v7x-safe)
        cap = 64 * 1024 * 1024
    return int(min(96 * 1024 * 1024, max(32 * 1024 * 1024, cap // 2)))


def _pick_tiles(B, C, vmem_limit, block_b, block_c):
    # Batch tile: multiple of 8; keep >=2 batch tiles so both v7x TCs get work.
    if block_b is not None:
        tb = block_b
    elif B <= 8:
        tb = B
    else:
        tb = min(256, max(8, ((B // 2) // 8) * 8))
    # Class tile: multiple of 128 (or the full, small class axis); sized so the
    # f32 temporaries (tb*tc*4 B) stay well inside the scoped-VMEM budget.
    if block_c is not None:
        tc = block_c
    elif C <= 128:
        tc = C
    else:
        budget = vmem_limit // 10
        tc = 128
        for cand in (8192, 4096, 2048, 1024, 512, 256):
            if tb * cand * 4 <= budget:
                tc = cand
                break
        tc = min(tc, _round_up(C, 128))
    assert tb == B or tb % 8 == 0, (B, tb)
    assert tc == C or tc % 128 == 0, (C, tc)
    return tb, tc


def admsoftmax_loss(logits, labels, s=30.0, m=0.4, *, block_b=None, block_c=None,
                    vmem_limit_bytes=None, batch_core_parallel=False,
                    logits_buffer_count=None):
    """Additive-margin softmax loss.

    logits: (B, C) float (f32 or bf16 — bf16 halves HBM traffic), labels: (B,) int.
    Returns a scalar f32 loss identical to the PyTorch reference.
    Labels are assumed valid in [0, C); out-of-range labels are clamped by the
    wrapper-side gather.  # TODO(synk): add an ignore_index mask if needed.
    """
    B, C = logits.shape
    if vmem_limit_bytes is None:
        vmem_limit_bytes = _default_vmem_limit_bytes()
    tb, tc = _pick_tiles(B, C, vmem_limit_bytes, block_b, block_c)

    nb = -(-B // tb)
    nk = -(-C // tc)
    b_pad = nb * tb
    lane_width = min(tc, 128)
    ragged = (C % tc) != 0

    # Pre-gather the target logit (B elements) with a cheap XLA gather; this
    # removes iota/compare/select and an extra reduction from the Pallas loop.
    labels_i32 = labels.astype(jnp.int32)
    target = jnp.take_along_axis(logits, labels_i32[:, None], axis=1)
    target = target.astype(jnp.float32)                      # (B, 1)

    kernel = functools.partial(_admsoftmax_kernel, s=float(s), m=float(m),
                               num_classes=C, ragged=ragged)

    if logits_buffer_count is not None and logits_buffer_count > 2:
        # Optional third buffer (useful on v5e once per-tile compute is short).
        logits_spec = pl.BlockSpec((tb, tc), lambda i, k: (i, k),
                                   pipeline_mode=pl.Buffered(logits_buffer_count))
    else:
        logits_spec = pl.BlockSpec((tb, tc), lambda i, k: (i, k))

    batch_sem = pltpu.CORE_PARALLEL if batch_core_parallel else "parallel"

    out = pl.pallas_call(
        kernel,
        out_shape=jax.ShapeDtypeStruct((b_pad, 128), jnp.float32),
        grid_spec=pltpu.PrefetchScalarGridSpec(
            num_scalar_prefetch=0,
            grid=(nb, nk),
            in_specs=[
                # Target logit: block index constant over the class loop.
                pl.BlockSpec((tb, 1), lambda i, k: (i, 0)),
                logits_spec,
            ],
            out_specs=pl.BlockSpec((tb, 128), lambda i, k: (i, 0)),
            scratch_shapes=[
                pltpu.VMEM((tb, lane_width), jnp.float32),   # per-lane running max
                pltpu.VMEM((tb, lane_width), jnp.float32),   # per-lane shifted exp-sum
            ],
        ),
        compiler_params=pltpu.CompilerParams(
            dimension_semantics=(batch_sem, "arbitrary"),
            vmem_limit_bytes=int(vmem_limit_bytes),
        ),
    )(target, logits)

    # Drop padded (garbage) batch rows, then do the single mean once, here.
    per_row = out[:B, 0]
    return -jnp.mean(per_row)


def _reference(logits, labels, s=30.0, m=0.4):
    logits = logits.astype(jnp.float32)
    B, C = logits.shape
    target = logits[jnp.arange(B), labels]
    numerator = s * (target - m)
    one_hot = jax.nn.one_hot(labels, C, dtype=jnp.float32)
    excl_sum = jnp.sum(jnp.exp(s * logits) * (1.0 - one_hot), axis=1)
    denominator = jnp.exp(numerator) + excl_sum
    L = numerator - jnp.log(denominator)
    return -jnp.mean(L)


if __name__ == "__main__":
    key = jax.random.PRNGKey(0)
    ks = jax.random.split(key, 6)

    # 1) Tiny single-tile case (C < 128 path), matching the module's toy usage.
    B, C = 8, 16
    logits = jax.random.uniform(ks[0], (B, C), jnp.float32, minval=-1.0, maxval=1.0)
    labels = jax.random.randint(ks[1], (B,), 0, C, dtype=jnp.int32)
    out = jax.block_until_ready(admsoftmax_loss(logits, labels, s=30.0, m=0.4))
    ref = _reference(logits, labels, s=30.0, m=0.4)
    assert jnp.allclose(out, ref, rtol=1e-4, atol=1e-4), (out, ref)

    # 2) Multi-tile (batch x class) grid with bf16 logits (halved HBM traffic).
    B2, C2 = 64, 512
    logits2 = jax.random.uniform(ks[2], (B2, C2), jnp.float32,
                                 minval=-1.0, maxval=1.0).astype(jnp.bfloat16)
    labels2 = jax.random.randint(ks[3], (B2,), 0, C2, dtype=jnp.int32)
    out2 = jax.block_until_ready(
        admsoftmax_loss(logits2, labels2, s=30.0, m=0.4, block_b=8, block_c=128))
    ref2 = _reference(logits2.astype(jnp.float32), labels2, s=30.0, m=0.4)
    assert jnp.allclose(out2, ref2, rtol=2e-4, atol=2e-4), (out2, ref2)

    # 3) Ragged shapes: cdiv grid + in-kernel class-tail mask + padded batch rows.
    B3, C3 = 20, 200
    logits3 = jax.random.uniform(ks[4], (B3, C3), jnp.float32, minval=-1.0, maxval=1.0)
    labels3 = jax.random.randint(ks[5], (B3,), 0, C3, dtype=jnp.int32)
    out3 = jax.block_until_ready(admsoftmax_loss(logits3, labels3, s=30.0, m=0.4))
    ref3 = _reference(logits3, labels3, s=30.0, m=0.4)
    assert jnp.allclose(out3, ref3, rtol=1e-4, atol=1e-4), (out3, ref3)

    print("KERNEL_OK")
</pallas_src>

<mosaic_0001>
module attributes {stable_mosaic.version = 11 : i64} {
  func.func @_admsoftmax_kernel(%arg0: i32, %arg1: i32, %arg2: memref<8x1xf32, #tpu.memory_space<vmem>>, %arg3: memref<8x16xf32, #tpu.memory_space<vmem>>, %arg4: memref<8x128xf32, #tpu.memory_space<vmem>>, %arg5: memref<8x16xf32, #tpu.memory_space<vmem>>, %arg6: memref<8x16xf32, #tpu.memory_space<vmem>>) attributes {dimension_semantics = [#tpu.dimension_semantics<parallel>, #tpu.dimension_semantics<arbitrary>], iteration_bounds = array<i64: 1, 1>, scalar_prefetch = 0 : i64, scratch_operands = 2 : i64, tpu.core_type = #tpu.core_type<tc>, window_params = [{transform_indices = @transform_0, window_bounds = array<i64: 8, 1>}, {transform_indices = @transform_1, window_bounds = array<i64: 8, 16>}, {transform_indices = @transform_2, window_bounds = array<i64: 8, 128>}]} {
    %c0_i32 = arith.constant 0 : i32
    %0 = arith.cmpi eq, %arg1, %c0_i32 : i32
    %1 = arith.extui %0 : i1 to i32
    %c0_i32_0 = arith.constant 0 : i32
    %2 = arith.cmpi ne, %1, %c0_i32_0 : i32
    scf.if %2 {
      %cst_12 = arith.constant -1.000000e+30 : f32
      %20 = vector.broadcast %cst_12 : f32 to vector<8x16xf32>
      %c0_13 = arith.constant 0 : index
      %c0_14 = arith.constant 0 : index
      %21 = vector.load %arg5[%c0_13, %c0_14] : memref<8x16xf32, #tpu.memory_space<vmem>>, vector<8x16xf32>
      tpu.vector_store %arg5[%c0_13, %c0_14], %20 {strides = array<i32>} : memref<8x16xf32, #tpu.memory_space<vmem>>, vector<8x16xf32>,
      %cst_15 = arith.constant 0.000000e+00 : f32
      %22 = vector.broadcast %cst_15 : f32 to vector<8x16xf32>
      %c0_16 = arith.constant 0 : index
      %c0_17 = arith.constant 0 : index
      %23 = vector.load %arg6[%c0_16, %c0_17] : memref<8x16xf32, #tpu.memory_space<vmem>>, vector<8x16xf32>
      tpu.vector_store %arg6[%c0_16, %c0_17], %22 {strides = array<i32>} : memref<8x16xf32, #tpu.memory_space<vmem>>, vector<8x16xf32>,
    } else {
    }
    %c0 = arith.constant 0 : index
    %c0_1 = arith.constant 0 : index
    %3 = vector.load %arg3[%c0, %c0_1] : memref<8x16xf32, #tpu.memory_space<vmem>>, vector<8x16xf32>
    %cst = arith.constant 3.000000e+01 : f32
    %4 = vector.broadcast %cst : f32 to vector<8x16xf32>
    %5 = arith.mulf %4, %3 : vector<8x16xf32>
    %c0_2 = arith.constant 0 : index
    %c0_3 = arith.constant 0 : index
    %6 = vector.load %arg5[%c0_2, %c0_3] : memref<8x16xf32, #tpu.memory_space<vmem>>, vector<8x16xf32>
    %7 = arith.maximumf %6, %5 : vector<8x16xf32>
    %c0_4 = arith.constant 0 : index
    %c0_5 = arith.constant 0 : index
    %8 = vector.load %arg6[%c0_4, %c0_5] : memref<8x16xf32, #tpu.memory_space<vmem>>, vector<8x16xf32>
    %9 = arith.subf %6, %7 : vector<8x16xf32>
    %10 = math.exp %9 : vector<8x16xf32>
    %11 = arith.mulf %8, %10 : vector<8x16xf32>
    %12 = arith.subf %5, %7 : vector<8x16xf32>
    %13 = math.exp %12 : vector<8x16xf32>
    %14 = arith.addf %11, %13 : vector<8x16xf32>
    %c0_6 = arith.constant 0 : index
    %c0_7 = arith.constant 0 : index
    %15 = vector.load %arg6[%c0_6, %c0_7] : memref<8x16xf32, #tpu.memory_space<vmem>>, vector<8x16xf32>
    tpu.vector_store %arg6[%c0_6, %c0_7], %14 {strides = array<i32>} : memref<8x16xf32, #tpu.memory_space<vmem>>, vector<8x16xf32>,
    %c0_8 = arith.constant 0 : index
    %c0_9 = arith.constant 0 : index
    %16 = vector.load %arg5[%c0_8, %c0_9] : memref<8x16xf32, #tpu.memory_space<vmem>>, vector<8x16xf32>
    tpu.vector_store %arg5[%c0_8, %c0_9], %7 {strides = array<i32>} : memref<8x16xf32, #tpu.memory_space<vmem>>, vector<8x16xf32>,
    %c0_i32_10 = arith.constant 0 : i32
    %17 = arith.cmpi eq, %arg1, %c0_i32_10 : i32
    %18 = arith.extui %17 : i1 to i32
    %c0_i32_11 = arith.constant 0 : i32
    %19 = arith.cmpi ne, %18, %c0_i32_11 : i32
    scf.if %19 {
      %c0_12 = arith.constant 0 : index
      %c0_13 = arith.constant 0 : index
      %20 = vector.load %arg5[%c0_12, %c0_13] : memref<8x16xf32, #tpu.memory_space<vmem>>, vector<8x16xf32>
      %cst_14 = arith.constant dense<0xFF800000> : vector<8xf32>
      %21 = vector.multi_reduction <maximumf>, %20, %cst_14 [1] : vector<8x16xf32> to vector<8xf32>
      %22 = vector.shape_cast %21 : vector<8xf32> to vector<8x1xf32>
      %23 = vector.broadcast %22 : vector<8x1xf32> to vector<8x16xf32>
      %24 = arith.subf %20, %23 : vector<8x16xf32>
      %25 = math.exp %24 : vector<8x16xf32>
      %c0_15 = arith.constant 0 : index
      %c0_16 = arith.constant 0 : index
      %26 = vector.load %arg6[%c0_15, %c0_16] : memref<8x16xf32, #tpu.memory_space<vmem>>, vector<8x16xf32>
      %27 = arith.mulf %25, %26 : vector<8x16xf32>
      %cst_17 = arith.constant dense<0.000000e+00> : vector<8xf32>
      %28 = vector.multi_reduction <add>, %27, %cst_17 [1] : vector<8x16xf32> to vector<8xf32>
      %29 = vector.shape_cast %28 : vector<8xf32> to vector<8x1xf32>
      %c0_18 = arith.constant 0 : index
      %c0_19 = arith.constant 0 : index
      %30 = vector.load %arg2[%c0_18, %c0_19] : memref<8x1xf32, #tpu.memory_space<vmem>>, vector<8x1xf32>
      %cst_20 = arith.constant 4.000000e-01 : f32
      %31 = vector.broadcast %cst_20 : f32 to vector<8x1xf32>
      %32 = arith.subf %30, %31 : vector<8x1xf32>
      %cst_21 = arith.constant 3.000000e+01 : f32
      %33 = vector.broadcast %cst_21 : f32 to vector<8x1xf32>
      %34 = arith.mulf %33, %32 : vector<8x1xf32>
      %cst_22 = arith.constant 3.000000e+01 : f32
      %35 = vector.broadcast %cst_22 : f32 to vector<8x1xf32>
      %36 = arith.mulf %35, %30 : vector<8x1xf32>
      %37 = arith.subf %36, %22 : vector<8x1xf32>
      %38 = math.exp %37 : vector<8x1xf32>
      %39 = arith.subf %29, %38 : vector<8x1xf32>
      %cst_23 = arith.constant 0.000000e+00 : f32
      %40 = vector.broadcast %cst_23 : f32 to vector<8x1xf32>
      %41 = arith.maximumf %39, %40 : vector<8x1xf32>
      %42 = arith.subf %34, %22 : vector<8x1xf32>
      %43 = math.exp %42 : vector<8x1xf32>
      %44 = arith.addf %43, %41 : vector<8x1xf32>
      %cst_24 = arith.constant 1.000000e-30 : f32
      %45 = vector.broadcast %cst_24 : f32 to vector<8x1xf32>
      %46 = arith.maximumf %44, %45 : vector<8x1xf32>
      %47 = math.log %46 : vector<8x1xf32>
      %48 = arith.addf %22, %47 : vector<8x1xf32>
      %49 = arith.subf %34, %48 : vector<8x1xf32>
      %50 = vector.shape_cast %49 : vector<8x1xf32> to vector<8x1xf32>
      %51 = vector.broadcast %50 : vector<8x1xf32> to vector<8x128xf32>
      %c0_25 = arith.constant 0 : index
      %c0_26 = arith.constant 0 : index
      %52 = vector.load %arg4[%c0_25, %c0_26] : memref<8x128xf32, #tpu.memory_space<vmem>>, vector<8x128xf32>
      tpu.vector_store %arg4[%c0_25, %c0_26], %51 {strides = array<i32>} : memref<8x128xf32, #tpu.memory_space<vmem>>, vector<8x128xf32>,
    } else {
    }
    return
  }
  func.func @transform_0(%arg0: i32, %arg1: i32) -> (i32, i32) {
    %c0_i32 = arith.constant 0 : i32
    %c0_i32_0 = arith.constant 0 : i32
    return %arg0, %c0_i32 : i32, i32
  }
  func.func @transform_1(%arg0: i32, %arg1: i32) -> (i32, i32) {
    %c0_i32 = arith.constant 0 : i32
    return %arg0, %arg1 : i32, i32
  }
  func.func @transform_2(%arg0: i32, %arg1: i32) -> (i32, i32) {
    %c0_i32 = arith.constant 0 : i32
    %c0_i32_0 = arith.constant 0 : i32
    return %arg0, %c0_i32 : i32, i32
  }
}

</mosaic_0001>

<llo_original>
// kernel: tpu_custom_call.1
$region0: #{tpu_custom_call.1}
  #allocation0 [shape = 'u32[]', space=smem, size = 0x4, offset = 0x4, fixed_abs, tag = 'smem constant byte address 0x4 - core index']
  #allocation1 [shape = 'u32[144,128]{1,0:T(1,128)}', space=vmem, size = 0x12000, scoped, tag = 'internal scratch']
  #allocation2 [shape = 'f32[8,16]{1,0:T(8,128)}', space=vmem, size = 0x1000, scoped, tag = 'scratch operand']
  #allocation3 [shape = 'f32[8,16]{1,0:T(8,128)}', space=vmem, size = 0x1000, scoped, tag = 'scratch operand']
  %s0 = inlined_call_operand.vmem [shape: f32[8,1], index: 0, kind: input, shape index: {}]
  %s1 = inlined_call_operand.vmem [shape: f32[8,16], index: 1, kind: input, shape index: {}]
  %s2 = inlined_call_operand.hbm [shape: f32[8,128], index: 2, kind: output, shape index: {}]
  %s3 = sld [smem:[#allocation0]]
  $region26: #{tpu_custom_call.1} parent=0
    _
  %s5 = ssub.s32 1, %s3
  %s6 = scalar_select 0, %s5, %s3
  $region1: #{tpu_custom_call.1} parent=0
    #allocation4 [shape = 'u8[4096]{0}', space=vmem, size = 0x1000, scoped, tag = 'output window, operand 0, single buffered']
    #allocation5 [shape = 's32[1]{0}', space=sflag, size = 0x4, scoped, tag = 'scoped memory for tpu_custom_call.1']
    %7 = vsyncpa [#allocation5], 0
    // Predicated region
    $region2: #{tpu_custom_call.1} parent=1 // pred_check
      _
    $region3: #{tpu_custom_call.1} parent=1 // pred_check_branch
      %9 = sbr.rel (0) target = $region5
    $region4: #{tpu_custom_call.1} parent=1 // pred_region
      _
    $region5: #{tpu_custom_call.1} parent=1 // pred_fallthru
      _
    // Predicated region
    $region6: #{tpu_custom_call.1} parent=1 // pred_check
      _
    $region7: #{tpu_custom_call.1} parent=1 // pred_check_branch
      %11 = sbr.rel (0) target = $region9
    $region8: #{tpu_custom_call.1} parent=1 // pred_region
      _
    $region9: #{tpu_custom_call.1} parent=1 // pred_fallthru
      _
    %p12 = scmp.eq.s32.totalorder 0, 0
    // Predicated region
    $region10: #{tpu_custom_call.1} parent=1 // pred_check
      %p13 = pneg %p12
    $region11: #{tpu_custom_call.1} parent=1 // pred_check_branch
      %15 = sbr.rel (%p13) target = $region13
    $region12: #{tpu_custom_call.1} parent=1 // pred_region
      %vm16 = vcmask 130048
      %17 = vst.msk [vmem:[#allocation2] sm:$0xff] %vm16, -1e+30
      %18 = vst.msk [vmem:[#allocation3] sm:$0xff] %vm16, 0.0
    $region13: #{tpu_custom_call.1} parent=1 // pred_fallthru
      _
    %v19 = vld [vmem:[%s1] sm:$0xff]
    %v20 = vmul.f32 %v19, 30.0
    %v21 = vld [vmem:[#allocation2] sm:$0xff]
    %v22 = vmax.f32 %v21, %v20
    %v23 = vld [vmem:[#allocation3] sm:$0xff]
    %v24 = vsub.f32 %v21, %v22
    %v25 = vmul.f32 %v24, 1.442695
    %v26 = vpow.pop %v25
    %v27 = vmul.f32 %v23, %v26
    %v28 = vsub.f32 %v20, %v22
    %v29 = vmul.f32 %v28, 1.442695
    %v30 = vpow.pop %v29
    %v31 = vadd.f32 %v27, %v30
    %vm32 = vcmask 130048
    %33 = vst.msk [vmem:[#allocation3] sm:$0xff] %vm32, %v31
    %34 = vst.msk [vmem:[#allocation2] sm:$0xff] %vm32, %v22
    // Predicated region
    $region14: #{tpu_custom_call.1} parent=1 // pred_check
      %p35 = pneg %p12
    $region15: #{tpu_custom_call.1} parent=1 // pred_check_branch
      %37 = sbr.rel (%p35) target = $region17
    $region16: #{tpu_custom_call.1} parent=1 // pred_region
      %v38 = vld [vmem:[#allocation2] sm:$0xff]
      %v39 = vsel %vm32, %v38, -inf
      %40 = vmax.xlane.f32.xlu0 %v39
      %v41 = vpop.xlane.xlu0 %40
      %v42 = vsub.f32 %v38, %v41
      %v43 = vmul.f32 %v42, 1.442695
      %v44 = vpow.pop %v43
      %v45 = vld [vmem:[#allocation3] sm:$0xff]
      %v46 = vmul.f32 %v44, %v45
      %v47 = vsel %vm32, %v46, 0.0
      %48 = vadd.xlane.f32.xlu0 %v47
      %v49 = vpop.xlane.xlu0 %48
      %v50 = vld [vmem:[%s0] sm:$0xff]
      %v51 = vsub.f32 %v50, 0.4
      %v52 = vmul.f32 %v51, 30.0
      %v53 = vmul.f32 %v50, 30.0
      %v54 = vsub.f32 %v53, %v41
      %v55 = vmul.f32 %v54, 1.442695
      %v56 = vpow.pop %v55
      %v57 = vsub.f32 %v49, %v56
      %v58 = vmax.f32 %v57, 0.0
      %v59 = vsub.f32 %v52, %v41
      %v60 = vmul.f32 %v59, 1.442695
      %v61 = vpow.pop %v60
      %v62 = vadd.f32 %v61, %v58
      %v63 = vmax.f32 %v62, 1e-30
      %v64 = vlog2.pop %v63
      %v65 = vmul.f32 %v64, 0.6931472
      %v66 = vadd.f32 %v41, %v65
      %v67 = vsub.f32 %v52, %v66
      %69 = vset.pattern.permute.xlu0 0
      %70 = vperm.xlu0 %69, %v67
      %v71 = vpop.permute.xlu0 %70
      %73 = vst [vmem:[#allocation4] sm:$0xff] %v71
    $region17: #{tpu_custom_call.1} parent=1 // pred_fallthru
      _
    // Predicated region
    $region18: #{tpu_custom_call.1} parent=1 // pred_check
      _
    $region19: #{tpu_custom_call.1} parent=1 // pred_check_branch
      %75 = sbr.rel (0) target = $region21
    $region20: #{tpu_custom_call.1} parent=1 // pred_region
      %s77 = ssub.s32 128, 128
      %78 = vsyncadd [#allocation5], %s77
      %s80 = sshll.u32 [#allocation4], 4
      %s81 = int_to_ptr.vmem [resolvable:$true] %s80
      %83 = dma.vmem_to_hbm [thread:$0]  %s81, 128, %s2, [#allocation5]
    $region21: #{tpu_custom_call.1} parent=1 // pred_fallthru
      _
    // Predicated region
    $region22: #{tpu_custom_call.1} parent=1 // pred_check
      _
    $region23: #{tpu_custom_call.1} parent=1 // pred_check_branch
      %85 = sbr.rel (0) target = $region25
    $region24: #{tpu_custom_call.1} parent=1 // pred_region
      %86 = dma.done [#allocation5], 128
    $region25: #{tpu_custom_call.1} parent=1 // pred_fallthru
      _
    %87 = vsyncpa [#allocation5], 1

</llo_original>
